<compile_context>
chip_gen: v5e
topology: v5e:2x2
jax: 0.10.0
libtpu: 0.0.40
codegen_flags: <defaults>
</compile_context>

<pallas_src>
import jax
import jax.numpy as jnp
from jax.experimental import pallas as pl
from jax.experimental.pallas import tpu as pltpu


def _round_up(x, m):
    return ((x + m - 1) // m) * m


def _cdiv(a, b):
    return (a + b - 1) // b


def rft_kernel(sd_ref, pred_ref, m_ref, b_ref, out_ref, acc_ref):
    # sd_ref  : (2, TB, TJ)      stacked [subj, dobj] slab over the j contraction axis
    # pred_ref: (TB, E)          full predicate embeddings (k-invariant -> stays resident)
    # m_ref   : (2, TJ*E, Opad)  fused weights  M[r][j*E+k, o] = sum_i T[i,j,k] * Wr[o,i]
    # b_ref   : (1, Opad)        b1 + b2
    # out_ref : (TB, Opad)       lane-padded output tile
    # acc_ref : (TB, Opad) f32   accumulator scratch (persists across the k grid axis)
    kslab = pl.program_id(1)

    @pl.when(kslab == 0)
    def _():
        acc_ref[...] = jnp.zeros_like(acc_ref)

    pred = pred_ref[...]                       # (TB, E)
    e = pred.shape[1]
    subj = sd_ref[0]                           # (TB, TJ)
    dobj = sd_ref[1]                           # (TB, TJ)
    tj = subj.shape[1]

    # Lane-dense outer products: op[b, j*E + k] = role[b, j] * pred[b, k].
    pred_t = jnp.tile(pred, (1, tj))                       # (TB, TJ*E): m -> pred[m % E]
    op_s = jnp.repeat(subj, e, axis=1) * pred_t            # (TB, TJ*E): m -> subj[m // E]
    op_d = jnp.repeat(dobj, e, axis=1) * pred_t

    wdt = m_ref.dtype                                      # cast ops to weight dtype (bf16 path)
    acc_ref[...] += (
        jnp.dot(op_s.astype(wdt), m_ref[0], preferred_element_type=jnp.float32)
        + jnp.dot(op_d.astype(wdt), m_ref[1], preferred_element_type=jnp.float32)
    )

    @pl.when(kslab == pl.num_programs(1) - 1)
    def _():
        out_ref[...] = (acc_ref[...] + b_ref[...]).astype(out_ref.dtype)


def prepack_rft_params(T, W1, b1, W2, b2, *, weight_dtype=jnp.float32,
                       out_lane_multiple=128):
    """One-time parameter prepack: fuse the role-tensor with both output linears."""
    H, E, _ = T.shape
    O = W1.shape[0]
    O_pad = _round_up(O, out_lane_multiple)

    t2 = jnp.transpose(T, (1, 2, 0)).reshape(E * E, H)     # t2[j*E+k, i] = T[i,j,k]
    m1 = t2 @ W1.T                                          # (E*E, O)
    m2 = t2 @ W2.T                                          # (E*E, O)
    m = jnp.stack([m1, m2], axis=0)                         # (2, E*E, O)
    bias = (b1 + b2).reshape(1, O)
    if O_pad != O:                                          # lane-dense output slab
        m = jnp.pad(m, ((0, 0), (0, 0), (0, O_pad - O)))
        bias = jnp.pad(bias, ((0, 0), (0, O_pad - O)))
    return {
        "m": m.astype(weight_dtype),
        "b": bias.astype(jnp.float32),
        "E": E, "H": H, "O": O, "O_pad": O_pad,
    }


def rft_forward(params, subj, pred, dobj, *, batch_tile=512, target_batch_steps=4,
                weight_vmem_budget=24 << 20):
    """Forward pass. subj/pred/dobj: (B, E) -> (B, O)."""
    E, O, O_pad = params["E"], params["O"], params["O_pad"]
    m, bias = params["m"], params["b"]
    B = subj.shape[0]
    abytes = jnp.dtype(subj.dtype).itemsize
    wbytes = jnp.dtype(m.dtype).itemsize

    # Batch tile: aim for >= target_batch_steps grid steps so v7x's two TensorCores
    # both get work and the pipeline has steps to hide activation/output DMA.
    tb = min(batch_tile, max(8, _round_up(_cdiv(B, target_batch_steps), 8)))
    nb = _cdiv(B, tb)

    # Contraction (j) slab: stream row-slabs of the fused weight when it would not
    # fit the per-core VMEM budget (v7x: 64 MiB total, ~24 MiB weight budget here).
    full_m_bytes = 2 * E * E * O_pad * wbytes
    nk, tj = 1, E
    if full_m_bytes > weight_vmem_budget:
        for d in range(2, E + 1):
            if E % d:
                continue
            tj_c = E // d
            if tj_c % 128:       # BlockSpec lane rule for the (2, TB, TJ) slab
                continue
            if 2 * (2 * tj_c * E * O_pad * wbytes) <= weight_vmem_budget:
                nk, tj = d, tj_c
                break
        # TODO(synk): if E has no 128-multiple divisor, we fall back to a fully
        # resident fused weight; add lane-padding of E to enable slabbing there.

    sd = jnp.stack([subj, dobj], axis=0)                    # (2, B, E): one role DMA/step
    grid = (nb, nk)

    vmem_limit = int(min(
        2 * (2 * tb * tj + tb * E) * abytes                 # sd + pred tiles (double-buffered)
        + 2 * (2 * tj * E * O_pad) * wbytes                 # fused weight slab (double-buffered)
        + 2 * O_pad * 4                                     # bias
        + 2 * tb * O_pad * abytes                           # output tile (double-buffered)
        + tb * O_pad * 4                                    # f32 accumulator scratch
        + 6 * tb * tj * E * 4                               # op_s/op_d + layout temps (fudge)
        + (8 << 20),                                        # headroom
        64 << 20))                                          # v7x per-core ceiling

    cost = pl.CostEstimate(
        flops=2 * 2 * B * (E * E) * O_pad + 4 * B * E * E,
        transcendentals=0,
        bytes_accessed=(3 * B * E + B * O_pad) * abytes
                       + (2 * E * E * O_pad + O_pad) * wbytes,
    )

    out = pl.pallas_call(
        rft_kernel,
        grid=grid,
        in_specs=[
            pl.BlockSpec((2, tb, tj), lambda i, k: (0, i, k)),        # stacked subj/dobj
            pl.BlockSpec((tb, E), lambda i, k: (i, 0)),               # pred (k-invariant)
            pl.BlockSpec((2, tj * E, O_pad), lambda i, k: (0, k, 0)),  # fused weight slab
            pl.BlockSpec((1, O_pad), lambda i, k: (0, 0)),            # fused bias
        ],
        out_specs=pl.BlockSpec((tb, O_pad), lambda i, k: (i, 0)),
        out_shape=jax.ShapeDtypeStruct((B, O_pad), subj.dtype),
        scratch_shapes=[pltpu.VMEM((tb, O_pad), jnp.float32)],
        compiler_params=pltpu.CompilerParams(
            dimension_semantics=("parallel", "arbitrary"),
            vmem_limit_bytes=vmem_limit,
        ),
        cost_estimate=cost,
    )(sd, pred, m, bias)
    return out[:, :O]


def role_factor_tensor_net(T, subj, pred, dobj, W1, b1, W2, b2):
    """Convenience wrapper matching the original module signature (prepack + forward)."""
    params = prepack_rft_params(T, W1, b1, W2, b2)
    return rft_forward(params, subj, pred, dobj)


def reference(T, subj, pred, dobj, W1, b1, W2, b2):
    v_s = jnp.einsum('ijk,bj,bk->bi', T, subj, pred)
    v_d = jnp.einsum('ijk,bj,bk->bi', T, dobj, pred)
    return v_s @ W1.T + b1 + v_d @ W2.T + b2


if __name__ == "__main__":
    # Small shapes consistent with the module's forward.
    B, E, H, O = 8, 16, 32, 32

    key = jax.random.PRNGKey(0)
    kT, kW1, kb1, kW2, kb2, ks, kp, kd = jax.random.split(key, 8)

    # T: xavier_uniform_ on shape (H, E, E): fan_in = E*E, fan_out = H*E
    bound_T = (6.0 / (E * E + H * E)) ** 0.5
    T = jax.random.uniform(kT, (H, E, E), jnp.float32, -bound_T, bound_T)

    # nn.Linear(hidden, output): weight (O, H), bias (O,)
    bound_W = (1.0 / H) ** 0.5
    W1 = jax.random.uniform(kW1, (O, H), jnp.float32, -bound_W, bound_W)
    b1 = jax.random.uniform(kb1, (O,), jnp.float32, -bound_W, bound_W)
    W2 = jax.random.uniform(kW2, (O, H), jnp.float32, -bound_W, bound_W)
    b2 = jax.random.uniform(kb2, (O,), jnp.float32, -bound_W, bound_W)

    subj = jax.random.normal(ks, (B, E), jnp.float32)
    pred = jax.random.normal(kp, (B, E), jnp.float32)
    dobj = jax.random.normal(kd, (B, E), jnp.float32)

    # Prepack once (hoisted out of the forward path); jit the forward so the
    # activation stack and the trailing O_pad -> O slice fuse into the call.
    prepacked = prepack_rft_params(T, W1, b1, W2, b2)
    fwd = jax.jit(lambda s, p, d: rft_forward(prepacked, s, p, d))

    out = jax.block_until_ready(fwd(subj, pred, dobj))

    ref = reference(T, subj, pred, dobj, W1, b1, W2, b2)
    assert out.shape == (B, O)
    assert jnp.allclose(out, ref, atol=1e-4, rtol=1e-4), "mismatch vs einsum reference"

    print("KERNEL_OK")
</pallas_src>

<mosaic_0001>
module attributes {stable_mosaic.version = 11 : i64} {
  func.func @rft_kernel(%arg0: i32, %arg1: i32, %arg2: memref<2x8x16xf32, #tpu.memory_space<vmem>>, %arg3: memref<8x16xf32, #tpu.memory_space<vmem>>, %arg4: memref<2x256x128xf32, #tpu.memory_space<vmem>>, %arg5: memref<1x128xf32, #tpu.memory_space<vmem>>, %arg6: memref<8x128xf32, #tpu.memory_space<vmem>>, %arg7: memref<8x128xf32, #tpu.memory_space<vmem>>) attributes {dimension_semantics = [#tpu.dimension_semantics<parallel>, #tpu.dimension_semantics<arbitrary>], iteration_bounds = array<i64: 1, 1>, scalar_prefetch = 0 : i64, scratch_operands = 1 : i64, tpu.core_type = #tpu.core_type<tc>, window_params = [{transform_indices = @transform_0, window_bounds = array<i64: 2, 8, 16>}, {transform_indices = @transform_1, window_bounds = array<i64: 8, 16>}, {transform_indices = @transform_2, window_bounds = array<i64: 2, 256, 128>}, {pipeline_mode = #tpu.pipeline_mode<synchronous>, transform_indices = @transform_3, window_bounds = array<i64: 1, 128>}, {transform_indices = @transform_4, window_bounds = array<i64: 8, 128>}]} {
    %c0_i32 = arith.constant 0 : i32
    %0 = arith.cmpi eq, %arg1, %c0_i32 : i32
    %1 = arith.extui %0 : i1 to i32
    %c0_i32_0 = arith.constant 0 : i32
    %2 = arith.cmpi ne, %1, %c0_i32_0 : i32
    scf.if %2 {
      %cst_20 = arith.constant 0.000000e+00 : f32
      %30 = vector.broadcast %cst_20 : f32 to vector<8x128xf32>
      %c0_21 = arith.constant 0 : index
      %c0_22 = arith.constant 0 : index
      %31 = vector.load %arg7[%c0_21, %c0_22] : memref<8x128xf32, #tpu.memory_space<vmem>>, vector<8x128xf32>
      tpu.vector_store %arg7[%c0_21, %c0_22], %30 {strides = array<i32>} : memref<8x128xf32, #tpu.memory_space<vmem>>, vector<8x128xf32>,
    } else {
    }
    %c0 = arith.constant 0 : index
    %c0_1 = arith.constant 0 : index
    %3 = vector.load %arg3[%c0, %c0_1] : memref<8x16xf32, #tpu.memory_space<vmem>>, vector<8x16xf32>
    %c0_2 = arith.constant 0 : index
    %c0_3 = arith.constant 0 : index
    %c0_4 = arith.constant 0 : index
    %4 = vector.load %arg2[%c0_2, %c0_3, %c0_4] : memref<2x8x16xf32, #tpu.memory_space<vmem>>, vector<1x8x16xf32>
    %5 = vector.shape_cast %4 : vector<1x8x16xf32> to vector<8x16xf32>
    %c1 = arith.constant 1 : index
    %c0_5 = arith.constant 0 : index
    %c0_6 = arith.constant 0 : index
    %6 = vector.load %arg2[%c1, %c0_5, %c0_6] : memref<2x8x16xf32, #tpu.memory_space<vmem>>, vector<1x8x16xf32>
    %7 = vector.shape_cast %6 : vector<1x8x16xf32> to vector<8x16xf32>
    %8 = tpu.concatenate %3, %3, %3, %3, %3, %3, %3, %3, %3, %3, %3, %3, %3, %3, %3, %3 in 1 : vector<8x16xf32>, vector<8x16xf32>, vector<8x16xf32>, vector<8x16xf32>, vector<8x16xf32>, vector<8x16xf32>, vector<8x16xf32>, vector<8x16xf32>, vector<8x16xf32>, vector<8x16xf32>, vector<8x16xf32>, vector<8x16xf32>, vector<8x16xf32>, vector<8x16xf32>, vector<8x16xf32>, vector<8x16xf32> -> vector<8x256xf32>
    %9 = vector.shape_cast %5 : vector<8x16xf32> to vector<8x16x1xf32>
    %10 = vector.broadcast %9 : vector<8x16x1xf32> to vector<8x16x16xf32>
    %11 = vector.shape_cast %10 : vector<8x16x16xf32> to vector<8x256xf32>
    %12 = arith.mulf %11, %8 : vector<8x256xf32>
    %13 = vector.shape_cast %7 : vector<8x16xf32> to vector<8x16x1xf32>
    %14 = vector.broadcast %13 : vector<8x16x1xf32> to vector<8x16x16xf32>
    %15 = vector.shape_cast %14 : vector<8x16x16xf32> to vector<8x256xf32>
    %16 = arith.mulf %15, %8 : vector<8x256xf32>
    %c0_7 = arith.constant 0 : index
    %c0_8 = arith.constant 0 : index
    %17 = vector.load %arg7[%c0_7, %c0_8] : memref<8x128xf32, #tpu.memory_space<vmem>>, vector<8x128xf32>
    %c0_9 = arith.constant 0 : index
    %c0_10 = arith.constant 0 : index
    %c0_11 = arith.constant 0 : index
    %18 = vector.load %arg4[%c0_9, %c0_10, %c0_11] : memref<2x256x128xf32, #tpu.memory_space<vmem>>, vector<1x256x128xf32>
    %19 = vector.shape_cast %18 : vector<1x256x128xf32> to vector<256x128xf32>
    %cst = arith.constant dense<0.000000e+00> : vector<8x128xf32>
    %20 = tpu.matmul %12, %19, %cst {dimension_numbers = #tpu.dot_dimension_numbers<[1], [0], [0], [1], [0, 0, 1, 1], [], []>} : vector<8x256xf32>, vector<256x128xf32>, vector<8x128xf32> -> vector<8x128xf32>
    %c1_12 = arith.constant 1 : index
    %c0_13 = arith.constant 0 : index
    %c0_14 = arith.constant 0 : index
    %21 = vector.load %arg4[%c1_12, %c0_13, %c0_14] : memref<2x256x128xf32, #tpu.memory_space<vmem>>, vector<1x256x128xf32>
    %22 = vector.shape_cast %21 : vector<1x256x128xf32> to vector<256x128xf32>
    %cst_15 = arith.constant dense<0.000000e+00> : vector<8x128xf32>
    %23 = tpu.matmul %16, %22, %cst_15 {dimension_numbers = #tpu.dot_dimension_numbers<[1], [0], [0], [1], [0, 0, 1, 1], [], []>} : vector<8x256xf32>, vector<256x128xf32>, vector<8x128xf32> -> vector<8x128xf32>
    %24 = arith.addf %20, %23 : vector<8x128xf32>
    %25 = arith.addf %17, %24 : vector<8x128xf32>
    %c0_16 = arith.constant 0 : index
    %c0_17 = arith.constant 0 : index
    %26 = vector.load %arg7[%c0_16, %c0_17] : memref<8x128xf32, #tpu.memory_space<vmem>>, vector<8x128xf32>
    tpu.vector_store %arg7[%c0_16, %c0_17], %25 {strides = array<i32>} : memref<8x128xf32, #tpu.memory_space<vmem>>, vector<8x128xf32>,
    %c0_i32_18 = arith.constant 0 : i32
    %27 = arith.cmpi eq, %arg1, %c0_i32_18 : i32
    %28 = arith.extui %27 : i1 to i32
    %c0_i32_19 = arith.constant 0 : i32
    %29 = arith.cmpi ne, %28, %c0_i32_19 : i32
    scf.if %29 {
      %c0_20 = arith.constant 0 : index
      %c0_21 = arith.constant 0 : index
      %30 = vector.load %arg7[%c0_20, %c0_21] : memref<8x128xf32, #tpu.memory_space<vmem>>, vector<8x128xf32>
      %c0_22 = arith.constant 0 : index
      %c0_23 = arith.constant 0 : index
      %31 = vector.load %arg5[%c0_22, %c0_23] : memref<1x128xf32, #tpu.memory_space<vmem>>, vector<1x128xf32>
      %32 = vector.broadcast %31 : vector<1x128xf32> to vector<8x128xf32>
      %33 = arith.addf %30, %32 : vector<8x128xf32>
      %c0_24 = arith.constant 0 : index
      %c0_25 = arith.constant 0 : index
      %34 = vector.load %arg6[%c0_24, %c0_25] : memref<8x128xf32, #tpu.memory_space<vmem>>, vector<8x128xf32>
      tpu.vector_store %arg6[%c0_24, %c0_25], %33 {strides = array<i32>} : memref<8x128xf32, #tpu.memory_space<vmem>>, vector<8x128xf32>,
    } else {
    }
    return
  }
  func.func @transform_0(%arg0: i32, %arg1: i32) -> (i32, i32, i32) {
    %c0_i32 = arith.constant 0 : i32
    %c0_i32_0 = arith.constant 0 : i32
    return %c0_i32, %arg0, %arg1 : i32, i32, i32
  }
  func.func @transform_1(%arg0: i32, %arg1: i32) -> (i32, i32) {
    %c0_i32 = arith.constant 0 : i32
    %c0_i32_0 = arith.constant 0 : i32
    return %arg0, %c0_i32 : i32, i32
  }
  func.func @transform_2(%arg0: i32, %arg1: i32) -> (i32, i32, i32) {
    %c0_i32 = arith.constant 0 : i32
    %c0_i32_0 = arith.constant 0 : i32
    %c0_i32_1 = arith.constant 0 : i32
    return %c0_i32, %arg1, %c0_i32_0 : i32, i32, i32
  }
  func.func @transform_3(%arg0: i32, %arg1: i32) -> (i32, i32) {
    %c0_i32 = arith.constant 0 : i32
    %c0_i32_0 = arith.constant 0 : i32
    %c0_i32_1 = arith.constant 0 : i32
    return %c0_i32, %c0_i32_0 : i32, i32
  }
  func.func @transform_4(%arg0: i32, %arg1: i32) -> (i32, i32) {
    %c0_i32 = arith.constant 0 : i32
    %c0_i32_0 = arith.constant 0 : i32
    return %arg0, %c0_i32 : i32, i32
  }
}

</mosaic_0001>

<llo_original>
// kernel: _lambda_.1
$region0: #{_lambda_.1}
  #allocation0 [shape = 'u32[]', space=smem, size = 0x4, offset = 0x4, fixed_abs, tag = 'smem constant byte address 0x4 - core index']
  #allocation1 [shape = 'u32[72,128]{1,0:T(1,128)}', space=vmem, size = 0x9000, scoped, tag = 'internal scratch']
  #allocation2 [shape = 'f32[8,128]{1,0:T(8,128)}', space=vmem, size = 0x1000, scoped, tag = 'scratch operand']
  %s0 = inlined_call_operand.vmem [shape: f32[2,8,16], index: 0, kind: input, shape index: {}]
  %s1 = inlined_call_operand.vmem [shape: f32[8,16], index: 1, kind: input, shape index: {}]
  %s2 = inlined_call_operand.hbm [shape: f32[2,256,128], index: 2, kind: input, shape index: {}]
  %s3 = inlined_call_operand.vmem [shape: f32[1,128], index: 3, kind: input, shape index: {}]
  %s4 = inlined_call_operand.hbm [shape: f32[8,128], index: 4, kind: output, shape index: {}]
  %s5 = sld [smem:[#allocation0]]
  $region38: #{_lambda_.1} parent=0
    _
  %s7 = ssub.s32 1, %s5
  %s8 = scalar_select 0, %s7, %s5
  $region1: #{_lambda_.1} parent=0
    #allocation3 [shape = 'u8[262144]{0}', space=vmem, size = 0x40000, scoped, tag = 'input window, operand 2, single buffered']
    #allocation4 [shape = 's32[1]{0}', space=sflag, size = 0x4, scoped, tag = 'scoped memory for _lambda_.1']
    #allocation5 [shape = 's32[1]{0}', space=sflag, size = 0x4, scoped, tag = 'scoped memory for _lambda_.1']
    #allocation6 [shape = 'u8[4096]{0}', space=vmem, size = 0x1000, scoped, tag = 'output window, operand 0, single buffered']
    %9 = vsyncpa [#allocation4], 0
    %10 = vsyncpa [#allocation5], 0
    // Predicated region
    $region2: #{_lambda_.1} parent=1 // pred_check
      _
    $region3: #{_lambda_.1} parent=1 // pred_check_branch
      %12 = sbr.rel (0) target = $region5
    $region4: #{_lambda_.1} parent=1 // pred_region
      _
    $region5: #{_lambda_.1} parent=1 // pred_fallthru
      _
    // Predicated region
    $region6: #{_lambda_.1} parent=1 // pred_check
      _
    $region7: #{_lambda_.1} parent=1 // pred_check_branch
      %14 = sbr.rel (0) target = $region9
    $region8: #{_lambda_.1} parent=1 // pred_region
      _
    $region9: #{_lambda_.1} parent=1 // pred_fallthru
      _
    // Predicated region
    $region10: #{_lambda_.1} parent=1 // pred_check
      _
    $region11: #{_lambda_.1} parent=1 // pred_check_branch
      %16 = sbr.rel (0) target = $region13
    $region12: #{_lambda_.1} parent=1 // pred_region
      %18 = vsyncadd [#allocation4], 0
      %s19 = sshll.u32 %s2, 4
      %s20 = int_to_ptr.hbm [resolvable:$true] %s19
      %s21 = sshll.u32 [#allocation3], 4
      %s22 = int_to_ptr.vmem [resolvable:$true] %s21
      %27 = dma.hbm_to_vmem [thread:$0]  %s20, 8192, %s22, [#allocation4], 128, 128, 8
    $region13: #{_lambda_.1} parent=1 // pred_fallthru
      _
    // Predicated region
    $region14: #{_lambda_.1} parent=1 // pred_check
      _
    $region15: #{_lambda_.1} parent=1 // pred_check_branch
      %29 = sbr.rel (0) target = $region17
    $region16: #{_lambda_.1} parent=1 // pred_region
      _
    $region17: #{_lambda_.1} parent=1 // pred_fallthru
      _
    // Predicated region
    $region18: #{_lambda_.1} parent=1 // pred_check
      _
    $region19: #{_lambda_.1} parent=1 // pred_check_branch
      %31 = sbr.rel (0) target = $region21
    $region20: #{_lambda_.1} parent=1 // pred_region
      %33 = dma.done [#allocation4], 8192
    $region21: #{_lambda_.1} parent=1 // pred_fallthru
      _
    %p34 = scmp.eq.s32.totalorder 0, 0
    // Predicated region
    $region22: #{_lambda_.1} parent=1 // pred_check
      %p35 = pneg %p34
    $region23: #{_lambda_.1} parent=1 // pred_check_branch
      %37 = sbr.rel (%p35) target = $region25
    $region24: #{_lambda_.1} parent=1 // pred_region
      %38 = vst [vmem:[#allocation2] sm:$0xff] 0.0
    $region25: #{_lambda_.1} parent=1 // pred_fallthru
      _
    %v39 = vld [vmem:[%s1] sm:$0xff]
    %v40 = vld [vmem:[%s0] sm:$0xff]
    %s41 = scalar_lea.vmem %s0, 8
    %v42 = vld [vmem:[%s41] sm:$0xff]
    %44 = vrot.lane.b32.xlu0 %v39, 16
    %v45 = vpop.permute.xlu0 %44
    %47 = vrot.lane.b32.xlu0 %v39, 32
    %v48 = vpop.permute.xlu0 %47
    %50 = vrot.lane.b32.xlu0 %v39, 48
    %v51 = vpop.permute.xlu0 %50
    %53 = vrot.lane.b32.xlu0 %v39, 64
    %v54 = vpop.permute.xlu0 %53
    %56 = vrot.lane.b32.xlu0 %v39, 80
    %v57 = vpop.permute.xlu0 %56
    %59 = vrot.lane.b32.xlu0 %v39, 96
    %v60 = vpop.permute.xlu0 %59
    %62 = vrot.lane.b32.xlu0 %v39, 112
    %v63 = vpop.permute.xlu0 %62
    %vm65 = vcmask 130048
    %v66 = vsel %vm65, %v39, %v45
    %vm67 = vcmask 261120
    %v68 = vsel %vm67, %v66, %v48
    %vm69 = vcmask 392192
    %v70 = vsel %vm69, %v68, %v51
    %vm71 = vcmask 523264
    %v72 = vsel %vm71, %v70, %v54
    %vm73 = vcmask 654336
    %v74 = vsel %vm73, %v72, %v57
    %vm75 = vcmask 785408
    %v76 = vsel %vm75, %v74, %v60
    %vm77 = vcmask 916480
    %v78 = vsel %vm77, %v76, %v63
    %v79 = vperm.slane %v40, 0
    %v80 = vlaneseq
    %v81 = vshrl.u32 %v80, 7
    %83 = vset.pattern.permute.xlu0 %v81
    %84 = vperm.xlu0 %83, %v79
    %v85 = vpop.permute.xlu0 %84
    %v86 = vlaneseq
    %v87 = vshrl.u32 %v86, 7
    %v88 = vadd.s32 %v87, 8
    %89 = vset.pattern.permute.xlu0 %v88
    %90 = vperm.xlu0 %89, %v79
    %v91 = vpop.permute.xlu0 %90
    %v92 = vperm.slane %v40, 1
    %v93 = vlaneseq
    %v94 = vshrl.u32 %v93, 7
    %96 = vset.pattern.permute.xlu0 %v94
    %97 = vperm.xlu0 %96, %v92
    %v98 = vpop.permute.xlu0 %97
    %v99 = vlaneseq
    %v100 = vshrl.u32 %v99, 7
    %v101 = vadd.s32 %v100, 8
    %102 = vset.pattern.permute.xlu0 %v101
    %103 = vperm.xlu0 %102, %v92
    %v104 = vpop.permute.xlu0 %103
    %v105 = vperm.slane %v40, 2
    %v106 = vlaneseq
    %v107 = vshrl.u32 %v106, 7
    %109 = vset.pattern.permute.xlu0 %v107
    %110 = vperm.xlu0 %109, %v105
    %v111 = vpop.permute.xlu0 %110
    %v112 = vlaneseq
    %v113 = vshrl.u32 %v112, 7
    %v114 = vadd.s32 %v113, 8
    %115 = vset.pattern.permute.xlu0 %v114
    %116 = vperm.xlu0 %115, %v105
    %v117 = vpop.permute.xlu0 %116
    %v118 = vperm.slane %v40, 3
    %v119 = vlaneseq
    %v120 = vshrl.u32 %v119, 7
    %122 = vset.pattern.permute.xlu0 %v120
    %123 = vperm.xlu0 %122, %v118
    %v124 = vpop.permute.xlu0 %123
    %v125 = vlaneseq
    %v126 = vshrl.u32 %v125, 7
    %v127 = vadd.s32 %v126, 8
    %128 = vset.pattern.permute.xlu0 %v127
    %129 = vperm.xlu0 %128, %v118
    %v130 = vpop.permute.xlu0 %129
    %v131 = vperm.slane %v40, 4
    %v132 = vlaneseq
    %v133 = vshrl.u32 %v132, 7
    %135 = vset.pattern.permute.xlu0 %v133
    %136 = vperm.xlu0 %135, %v131
    %v137 = vpop.permute.xlu0 %136
    %v138 = vlaneseq
    %v139 = vshrl.u32 %v138, 7
    %v140 = vadd.s32 %v139, 8
    %141 = vset.pattern.permute.xlu0 %v140
    %142 = vperm.xlu0 %141, %v131
    %v143 = vpop.permute.xlu0 %142
    %v144 = vperm.slane %v40, 5
    %v145 = vlaneseq
    %v146 = vshrl.u32 %v145, 7
    %148 = vset.pattern.permute.xlu0 %v146
    %149 = vperm.xlu0 %148, %v144
    %v150 = vpop.permute.xlu0 %149
    %v151 = vlaneseq
    %v152 = vshrl.u32 %v151, 7
    %v153 = vadd.s32 %v152, 8
    %154 = vset.pattern.permute.xlu0 %v153
    %155 = vperm.xlu0 %154, %v144
    %v156 = vpop.permute.xlu0 %155
    %v157 = vperm.slane %v40, 6
    %v158 = vlaneseq
    %v159 = vshrl.u32 %v158, 7
    %161 = vset.pattern.permute.xlu0 %v159
    %162 = vperm.xlu0 %161, %v157
    %v163 = vpop.permute.xlu0 %162
    %v164 = vlaneseq
    %v165 = vshrl.u32 %v164, 7
    %v166 = vadd.s32 %v165, 8
    %167 = vset.pattern.permute.xlu0 %v166
    %168 = vperm.xlu0 %167, %v157
    %v169 = vpop.permute.xlu0 %168
    %v170 = vperm.slane %v40, 7
    %v171 = vlaneseq
    %v172 = vshrl.u32 %v171, 7
    %174 = vset.pattern.permute.xlu0 %v172
    %175 = vperm.xlu0 %174, %v170
    %v176 = vpop.permute.xlu0 %175
    %v177 = vlaneseq
    %v178 = vshrl.u32 %v177, 7
    %v179 = vadd.s32 %v178, 8
    %180 = vset.pattern.permute.xlu0 %v179
    %181 = vperm.xlu0 %180, %v170
    %v182 = vpop.permute.xlu0 %181
    %v183 = vrot.slane %v111, 4
    %vm184 = vcmask 1047556
    %v185 = vsel %vm184, %v183, %v85
    %v186 = vrot.slane %v85, 4
    %v187 = vsel %vm184, %v111, %v186
    %v189 = vunpack.c.l.s4 1983009808
    %v190 = vunpack.c.0.s8 %v189
    %v191 = vperm.slane %v185, %v190
    %v193 = vunpack.c.l.s4 1983009808
    %v194 = vunpack.c.0.s8 %v193
    %v195 = vperm.slane %v187, %v194
    %v196 = vrot.slane %v124, 4
    %v197 = vsel %vm184, %v196, %v98
    %v198 = vrot.slane %v98, 4
    %v199 = vsel %vm184, %v124, %v198
    %v201 = vunpack.c.l.s4 1983009808
    %v202 = vunpack.c.0.s8 %v201
    %v203 = vperm.slane %v197, %v202
    %v205 = vunpack.c.l.s4 1983009808
    %v206 = vunpack.c.0.s8 %v205
    %v207 = vperm.slane %v199, %v206
    %v208 = vrot.slane %v163, 4
    %v209 = vsel %vm184, %v208, %v137
    %v210 = vrot.slane %v137, 4
    %v211 = vsel %vm184, %v163, %v210
    %v213 = vunpack.c.l.s4 1983009808
    %v214 = vunpack.c.0.s8 %v213
    %v215 = vperm.slane %v209, %v214
    %v217 = vunpack.c.l.s4 1983009808
    %v218 = vunpack.c.0.s8 %v217
    %v219 = vperm.slane %v211, %v218
    %v220 = vrot.slane %v176, 4
    %v221 = vsel %vm184, %v220, %v150
    %v222 = vrot.slane %v150, 4
    %v223 = vsel %vm184, %v176, %v222
    %v225 = vunpack.c.l.s4 1983009808
    %v226 = vunpack.c.0.s8 %v225
    %v227 = vperm.slane %v221, %v226
    %v229 = vunpack.c.l.s4 1983009808
    %v230 = vunpack.c.0.s8 %v229
    %v231 = vperm.slane %v223, %v230
    %v232 = vrot.slane %v203, 4
    %v233 = vsel %vm184, %v232, %v191
    %v234 = vrot.slane %v191, 4
    %v235 = vsel %vm184, %v203, %v234
    %v237 = vunpack.c.l.s4 1934713408
    %v238 = vunpack.c.0.s8 %v237
    %v239 = vperm.slane %v233, %v238
    %v241 = vunpack.c.l.s4 1934713408
    %v242 = vunpack.c.0.s8 %v241
    %v243 = vperm.slane %v235, %v242
    %v244 = vrot.slane %v207, 4
    %v245 = vsel %vm184, %v244, %v195
    %v246 = vrot.slane %v195, 4
    %v247 = vsel %vm184, %v207, %v246
    %v249 = vunpack.c.l.s4 1934713408
    %v250 = vunpack.c.0.s8 %v249
    %v251 = vperm.slane %v245, %v250
    %v253 = vunpack.c.l.s4 1934713408
    %v254 = vunpack.c.0.s8 %v253
    %v255 = vperm.slane %v247, %v254
    %v256 = vrot.slane %v227, 4
    %v257 = vsel %vm184, %v256, %v215
    %v258 = vrot.slane %v215, 4
    %v259 = vsel %vm184, %v227, %v258
    %v261 = vunpack.c.l.s4 1934713408
    %v262 = vunpack.c.0.s8 %v261
    %v263 = vperm.slane %v257, %v262
    %v265 = vunpack.c.l.s4 1934713408
    %v266 = vunpack.c.0.s8 %v265
    %v267 = vperm.slane %v259, %v266
    %v268 = vrot.slane %v231, 4
    %v269 = vsel %vm184, %v268, %v219
    %v270 = vrot.slane %v219, 4
    %v271 = vsel %vm184, %v231, %v270
    %v273 = vunpack.c.l.s4 1934713408
    %v274 = vunpack.c.0.s8 %v273
    %v275 = vperm.slane %v269, %v274
    %v277 = vunpack.c.l.s4 1934713408
    %v278 = vunpack.c.0.s8 %v277
    %v279 = vperm.slane %v271, %v278
    %v280 = vrot.slane %v263, 4
    %v281 = vsel %vm184, %v280, %v239
    %v282 = vrot.slane %v239, 4
    %v283 = vsel %vm184, %v263, %v282
    %v284 = vrot.slane %v267, 4
    %v285 = vsel %vm184, %v284, %v243
    %v286 = vrot.slane %v243, 4
    %v287 = vsel %vm184, %v267, %v286
    %v288 = vrot.slane %v275, 4
    %v289 = vsel %vm184, %v288, %v251
    %v290 = vrot.slane %v251, 4
    %v291 = vsel %vm184, %v275, %v290
    %v292 = vrot.slane %v279, 4
    %v293 = vsel %vm184, %v292, %v255
    %v294 = vrot.slane %v255, 4
    %v295 = vsel %vm184, %v279, %v294
    %v296 = vrot.slane %v117, 4
    %v297 = vsel %vm184, %v296, %v91
    %v298 = vrot.slane %v91, 4
    %v299 = vsel %vm184, %v117, %v298
    %v301 = vunpack.c.l.s4 1983009808
    %v302 = vunpack.c.0.s8 %v301
    %v303 = vperm.slane %v297, %v302
    %v305 = vunpack.c.l.s4 1983009808
    %v306 = vunpack.c.0.s8 %v305
    %v307 = vperm.slane %v299, %v306
    %v308 = vrot.slane %v130, 4
    %v309 = vsel %vm184, %v308, %v104
    %v310 = vrot.slane %v104, 4
    %v311 = vsel %vm184, %v130, %v310
    %v313 = vunpack.c.l.s4 1983009808
    %v314 = vunpack.c.0.s8 %v313
    %v315 = vperm.slane %v309, %v314
    %v317 = vunpack.c.l.s4 1983009808
    %v318 = vunpack.c.0.s8 %v317
    %v319 = vperm.slane %v311, %v318
    %v320 = vrot.slane %v169, 4
    %v321 = vsel %vm184, %v320, %v143
    %v322 = vrot.slane %v143, 4
    %v323 = vsel %vm184, %v169, %v322
    %v325 = vunpack.c.l.s4 1983009808
    %v326 = vunpack.c.0.s8 %v325
    %v327 = vperm.slane %v321, %v326
    %v329 = vunpack.c.l.s4 1983009808
    %v330 = vunpack.c.0.s8 %v329
    %v331 = vperm.slane %v323, %v330
    %v332 = vrot.slane %v182, 4
    %v333 = vsel %vm184, %v332, %v156
    %v334 = vrot.slane %v156, 4
    %v335 = vsel %vm184, %v182, %v334
    %v337 = vunpack.c.l.s4 1983009808
    %v338 = vunpack.c.0.s8 %v337
    %v339 = vperm.slane %v333, %v338
    %v341 = vunpack.c.l.s4 1983009808
    %v342 = vunpack.c.0.s8 %v341
    %v343 = vperm.slane %v335, %v342
    %v344 = vrot.slane %v315, 4
    %v345 = vsel %vm184, %v344, %v303
    %v346 = vrot.slane %v303, 4
    %v347 = vsel %vm184, %v315, %v346
    %v349 = vunpack.c.l.s4 1934713408
    %v350 = vunpack.c.0.s8 %v349
    %v351 = vperm.slane %v345, %v350
    %v353 = vunpack.c.l.s4 1934713408
    %v354 = vunpack.c.0.s8 %v353
    %v355 = vperm.slane %v347, %v354
    %v356 = vrot.slane %v319, 4
    %v357 = vsel %vm184, %v356, %v307
    %v358 = vrot.slane %v307, 4
    %v359 = vsel %vm184, %v319, %v358
    %v361 = vunpack.c.l.s4 1934713408
    %v362 = vunpack.c.0.s8 %v361
    %v363 = vperm.slane %v357, %v362
    %v365 = vunpack.c.l.s4 1934713408
    %v366 = vunpack.c.0.s8 %v365
    %v367 = vperm.slane %v359, %v366
    %v368 = vrot.slane %v339, 4
    %v369 = vsel %vm184, %v368, %v327
    %v370 = vrot.slane %v327, 4
    %v371 = vsel %vm184, %v339, %v370
    %v373 = vunpack.c.l.s4 1934713408
    %v374 = vunpack.c.0.s8 %v373
    %v375 = vperm.slane %v369, %v374
    %v377 = vunpack.c.l.s4 1934713408
    %v378 = vunpack.c.0.s8 %v377
    %v379 = vperm.slane %v371, %v378
    %v380 = vrot.slane %v343, 4
    %v381 = vsel %vm184, %v380, %v331
    %v382 = vrot.slane %v331, 4
    %v383 = vsel %vm184, %v343, %v382
    %v385 = vunpack.c.l.s4 1934713408
    %v386 = vunpack.c.0.s8 %v385
    %v387 = vperm.slane %v381, %v386
    %v389 = vunpack.c.l.s4 1934713408
    %v390 = vunpack.c.0.s8 %v389
    %v391 = vperm.slane %v383, %v390
    %v392 = vrot.slane %v375, 4
    %v393 = vsel %vm184, %v392, %v351
    %v394 = vrot.slane %v351, 4
    %v395 = vsel %vm184, %v375, %v394
    %v396 = vrot.slane %v379, 4
    %v397 = vsel %vm184, %v396, %v355
    %v398 = vrot.slane %v355, 4
    %v399 = vsel %vm184, %v379, %v398
    %v400 = vrot.slane %v387, 4
    %v401 = vsel %vm184, %v400, %v363
    %v402 = vrot.slane %v363, 4
    %v403 = vsel %vm184, %v387, %v402
    %v404 = vrot.slane %v391, 4
    %v405 = vsel %vm184, %v404, %v367
    %v406 = vrot.slane %v367, 4
    %v407 = vsel %vm184, %v391, %v406
    %409 = vrot.lane.b32.xlu0 %v283, 16
    %v410 = vpop.permute.xlu0 %409
    %413 = vrot.lane.b32.xlu0 %v285, 32
    %v414 = vpop.permute.xlu0 %413
    %417 = vrot.lane.b32.xlu0 %v287, 48
    %v418 = vpop.permute.xlu0 %417
    %421 = vrot.lane.b32.xlu0 %v289, 64
    %v422 = vpop.permute.xlu0 %421
    %425 = vrot.lane.b32.xlu0 %v291, 80
    %v426 = vpop.permute.xlu0 %425
    %429 = vrot.lane.b32.xlu0 %v293, 96
    %v430 = vpop.permute.xlu0 %429
    %433 = vrot.lane.b32.xlu0 %v295, 112
    %v434 = vpop.permute.xlu0 %433
    %437 = vrot.lane.b32.xlu0 %v395, 16
    %v438 = vpop.permute.xlu0 %437
    %441 = vrot.lane.b32.xlu0 %v397, 32
    %v442 = vpop.permute.xlu0 %441
    %445 = vrot.lane.b32.xlu0 %v399, 48
    %v446 = vpop.permute.xlu0 %445
    %449 = vrot.lane.b32.xlu0 %v401, 64
    %v450 = vpop.permute.xlu0 %449
    %453 = vrot.lane.b32.xlu0 %v403, 80
    %v454 = vpop.permute.xlu0 %453
    %457 = vrot.lane.b32.xlu0 %v405, 96
    %v458 = vpop.permute.xlu0 %457
    %461 = vrot.lane.b32.xlu0 %v407, 112
    %v462 = vpop.permute.xlu0 %461
    %v464 = vsel %vm65, %v281, %v410
    %v465 = vsel %vm67, %v464, %v414
    %v466 = vsel %vm69, %v465, %v418
    %v467 = vsel %vm71, %v466, %v422
    %v468 = vsel %vm73, %v467, %v426
    %v469 = vsel %vm75, %v468, %v430
    %v470 = vsel %vm77, %v469, %v434
    %v471 = vsel %vm65, %v393, %v438
    %v472 = vsel %vm67, %v471, %v442
    %v473 = vsel %vm69, %v472, %v446
    %v474 = vsel %vm71, %v473, %v450
    %v475 = vsel %vm73, %v474, %v454
    %v476 = vsel %vm75, %v475, %v458
    %v477 = vsel %vm77, %v476, %v462
    %v478 = vmul.f32 %v470, %v78
    %v479 = vmul.f32 %v477, %v78
    %v480 = vperm.slane %v42, 0
    %v481 = vlaneseq
    %v482 = vshrl.u32 %v481, 7
    %484 = vset.pattern.permute.xlu0 %v482
    %485 = vperm.xlu0 %484, %v480
    %v486 = vpop.permute.xlu0 %485
    %v487 = vlaneseq
    %v488 = vshrl.u32 %v487, 7
    %v489 = vadd.s32 %v488, 8
    %490 = vset.pattern.permute.xlu0 %v489
    %491 = vperm.xlu0 %490, %v480
    %v492 = vpop.permute.xlu0 %491
    %v493 = vperm.slane %v42, 1
    %v494 = vlaneseq
    %v495 = vshrl.u32 %v494, 7
    %497 = vset.pattern.permute.xlu0 %v495
    %498 = vperm.xlu0 %497, %v493
    %v499 = vpop.permute.xlu0 %498
    %v500 = vlaneseq
    %v501 = vshrl.u32 %v500, 7
    %v502 = vadd.s32 %v501, 8
    %503 = vset.pattern.permute.xlu0 %v502
    %504 = vperm.xlu0 %503, %v493
    %v505 = vpop.permute.xlu0 %504
    %v506 = vperm.slane %v42, 2
    %v507 = vlaneseq
    %v508 = vshrl.u32 %v507, 7
    %510 = vset.pattern.permute.xlu0 %v508
    %511 = vperm.xlu0 %510, %v506
    %v512 = vpop.permute.xlu0 %511
    %v513 = vlaneseq
    %v514 = vshrl.u32 %v513, 7
    %v515 = vadd.s32 %v514, 8
    %516 = vset.pattern.permute.xlu0 %v515
    %517 = vperm.xlu0 %516, %v506
    %v518 = vpop.permute.xlu0 %517
    %v519 = vperm.slane %v42, 3
    %v520 = vlaneseq
    %v521 = vshrl.u32 %v520, 7
    %523 = vset.pattern.permute.xlu0 %v521
    %524 = vperm.xlu0 %523, %v519
    %v525 = vpop.permute.xlu0 %524
    %v526 = vlaneseq
    %v527 = vshrl.u32 %v526, 7
    %v528 = vadd.s32 %v527, 8
    %529 = vset.pattern.permute.xlu0 %v528
    %530 = vperm.xlu0 %529, %v519
    %v531 = vpop.permute.xlu0 %530
    %v532 = vperm.slane %v42, 4
    %v533 = vlaneseq
    %v534 = vshrl.u32 %v533, 7
    %536 = vset.pattern.permute.xlu0 %v534
    %537 = vperm.xlu0 %536, %v532
    %v538 = vpop.permute.xlu0 %537
    %v539 = vlaneseq
    %v540 = vshrl.u32 %v539, 7
    %v541 = vadd.s32 %v540, 8
    %542 = vset.pattern.permute.xlu0 %v541
    %543 = vperm.xlu0 %542, %v532
    %v544 = vpop.permute.xlu0 %543
    %v545 = vperm.slane %v42, 5
    %v546 = vlaneseq
    %v547 = vshrl.u32 %v546, 7
    %549 = vset.pattern.permute.xlu0 %v547
    %550 = vperm.xlu0 %549, %v545
    %v551 = vpop.permute.xlu0 %550
    %v552 = vlaneseq
    %v553 = vshrl.u32 %v552, 7
    %v554 = vadd.s32 %v553, 8
    %555 = vset.pattern.permute.xlu0 %v554
    %556 = vperm.xlu0 %555, %v545
    %v557 = vpop.permute.xlu0 %556
    %v558 = vperm.slane %v42, 6
    %v559 = vlaneseq
    %v560 = vshrl.u32 %v559, 7
    %562 = vset.pattern.permute.xlu0 %v560
    %563 = vperm.xlu0 %562, %v558
    %v564 = vpop.permute.xlu0 %563
    %v565 = vlaneseq
    %v566 = vshrl.u32 %v565, 7
    %v567 = vadd.s32 %v566, 8
    %568 = vset.pattern.permute.xlu0 %v567
    %569 = vperm.xlu0 %568, %v558
    %v570 = vpop.permute.xlu0 %569
    %v571 = vperm.slane %v42, 7
    %v572 = vlaneseq
    %v573 = vshrl.u32 %v572, 7
    %575 = vset.pattern.permute.xlu0 %v573
    %576 = vperm.xlu0 %575, %v571
    %v577 = vpop.permute.xlu0 %576
    %v578 = vlaneseq
    %v579 = vshrl.u32 %v578, 7
    %v580 = vadd.s32 %v579, 8
    %581 = vset.pattern.permute.xlu0 %v580
    %582 = vperm.xlu0 %581, %v571
    %v583 = vpop.permute.xlu0 %582
    %v584 = vrot.slane %v512, 4
    %v585 = vsel %vm184, %v584, %v486
    %v586 = vrot.slane %v486, 4
    %v587 = vsel %vm184, %v512, %v586
    %v589 = vunpack.c.l.s4 1983009808
    %v590 = vunpack.c.0.s8 %v589
    %v591 = vperm.slane %v585, %v590
    %v593 = vunpack.c.l.s4 1983009808
    %v594 = vunpack.c.0.s8 %v593
    %v595 = vperm.slane %v587, %v594
    %v596 = vrot.slane %v525, 4
    %v597 = vsel %vm184, %v596, %v499
    %v598 = vrot.slane %v499, 4
    %v599 = vsel %vm184, %v525, %v598
    %v601 = vunpack.c.l.s4 1983009808
    %v602 = vunpack.c.0.s8 %v601
    %v603 = vperm.slane %v597, %v602
    %v605 = vunpack.c.l.s4 1983009808
    %v606 = vunpack.c.0.s8 %v605
    %v607 = vperm.slane %v599, %v606
    %v608 = vrot.slane %v564, 4
    %v609 = vsel %vm184, %v608, %v538
    %v610 = vrot.slane %v538, 4
    %v611 = vsel %vm184, %v564, %v610
    %v613 = vunpack.c.l.s4 1983009808
    %v614 = vunpack.c.0.s8 %v613
    %v615 = vperm.slane %v609, %v614
    %v617 = vunpack.c.l.s4 1983009808
    %v618 = vunpack.c.0.s8 %v617
    %v619 = vperm.slane %v611, %v618
    %v620 = vrot.slane %v577, 4
    %v621 = vsel %vm184, %v620, %v551
    %v622 = vrot.slane %v551, 4
    %v623 = vsel %vm184, %v577, %v622
    %v625 = vunpack.c.l.s4 1983009808
    %v626 = vunpack.c.0.s8 %v625
    %v627 = vperm.slane %v621, %v626
    %v629 = vunpack.c.l.s4 1983009808
    %v630 = vunpack.c.0.s8 %v629
    %v631 = vperm.slane %v623, %v630
    %v632 = vrot.slane %v603, 4
    %v633 = vsel %vm184, %v632, %v591
    %v634 = vrot.slane %v591, 4
    %v635 = vsel %vm184, %v603, %v634
    %v637 = vunpack.c.l.s4 1934713408
    %v638 = vunpack.c.0.s8 %v637
    %v639 = vperm.slane %v633, %v638
    %v641 = vunpack.c.l.s4 1934713408
    %v642 = vunpack.c.0.s8 %v641
    %v643 = vperm.slane %v635, %v642
    %v644 = vrot.slane %v607, 4
    %v645 = vsel %vm184, %v644, %v595
    %v646 = vrot.slane %v595, 4
    %v647 = vsel %vm184, %v607, %v646
    %v649 = vunpack.c.l.s4 1934713408
    %v650 = vunpack.c.0.s8 %v649
    %v651 = vperm.slane %v645, %v650
    %v653 = vunpack.c.l.s4 1934713408
    %v654 = vunpack.c.0.s8 %v653
    %v655 = vperm.slane %v647, %v654
    %v656 = vrot.slane %v627, 4
    %v657 = vsel %vm184, %v656, %v615
    %v658 = vrot.slane %v615, 4
    %v659 = vsel %vm184, %v627, %v658
    %v661 = vunpack.c.l.s4 1934713408
    %v662 = vunpack.c.0.s8 %v661
    %v663 = vperm.slane %v657, %v662
    %v665 = vunpack.c.l.s4 1934713408
    %v666 = vunpack.c.0.s8 %v665
    %v667 = vperm.slane %v659, %v666
    %v668 = vrot.slane %v631, 4
    %v669 = vsel %vm184, %v668, %v619
    %v670 = vrot.slane %v619, 4
    %v671 = vsel %vm184, %v631, %v670
    %v673 = vunpack.c.l.s4 1934713408
    %v674 = vunpack.c.0.s8 %v673
    %v675 = vperm.slane %v669, %v674
    %v677 = vunpack.c.l.s4 1934713408
    %v678 = vunpack.c.0.s8 %v677
    %v679 = vperm.slane %v671, %v678
    %v680 = vrot.slane %v663, 4
    %v681 = vsel %vm184, %v680, %v639
    %v682 = vrot.slane %v639, 4
    %v683 = vsel %vm184, %v663, %v682
    %v684 = vrot.slane %v667, 4
    %v685 = vsel %vm184, %v684, %v643
    %v686 = vrot.slane %v643, 4
    %v687 = vsel %vm184, %v667, %v686
    %v688 = vrot.slane %v675, 4
    %v689 = vsel %vm184, %v688, %v651
    %v690 = vrot.slane %v651, 4
    %v691 = vsel %vm184, %v675, %v690
    %v692 = vrot.slane %v679, 4
    %v693 = vsel %vm184, %v692, %v655
    %v694 = vrot.slane %v655, 4
    %v695 = vsel %vm184, %v679, %v694
    %v696 = vrot.slane %v518, 4
    %v697 = vsel %vm184, %v696, %v492
    %v698 = vrot.slane %v492, 4
    %v699 = vsel %vm184, %v518, %v698
    %v701 = vunpack.c.l.s4 1983009808
    %v702 = vunpack.c.0.s8 %v701
    %v703 = vperm.slane %v697, %v702
    %v705 = vunpack.c.l.s4 1983009808
    %v706 = vunpack.c.0.s8 %v705
    %v707 = vperm.slane %v699, %v706
    %v708 = vrot.slane %v531, 4
    %v709 = vsel %vm184, %v708, %v505
    %v710 = vrot.slane %v505, 4
    %v711 = vsel %vm184, %v531, %v710
    %v713 = vunpack.c.l.s4 1983009808
    %v714 = vunpack.c.0.s8 %v713
    %v715 = vperm.slane %v709, %v714
    %v717 = vunpack.c.l.s4 1983009808
    %v718 = vunpack.c.0.s8 %v717
    %v719 = vperm.slane %v711, %v718
    %v720 = vrot.slane %v570, 4
    %v721 = vsel %vm184, %v720, %v544
    %v722 = vrot.slane %v544, 4
    %v723 = vsel %vm184, %v570, %v722
    %v725 = vunpack.c.l.s4 1983009808
    %v726 = vunpack.c.0.s8 %v725
    %v727 = vperm.slane %v721, %v726
    %v729 = vunpack.c.l.s4 1983009808
    %v730 = vunpack.c.0.s8 %v729
    %v731 = vperm.slane %v723, %v730
    %v732 = vrot.slane %v583, 4
    %v733 = vsel %vm184, %v732, %v557
    %v734 = vrot.slane %v557, 4
    %v735 = vsel %vm184, %v583, %v734
    %v737 = vunpack.c.l.s4 1983009808
    %v738 = vunpack.c.0.s8 %v737
    %v739 = vperm.slane %v733, %v738
    %v741 = vunpack.c.l.s4 1983009808
    %v742 = vunpack.c.0.s8 %v741
    %v743 = vperm.slane %v735, %v742
    %v744 = vrot.slane %v715, 4
    %v745 = vsel %vm184, %v744, %v703
    %v746 = vrot.slane %v703, 4
    %v747 = vsel %vm184, %v715, %v746
    %v749 = vunpack.c.l.s4 1934713408
    %v750 = vunpack.c.0.s8 %v749
    %v751 = vperm.slane %v745, %v750
    %v753 = vunpack.c.l.s4 1934713408
    %v754 = vunpack.c.0.s8 %v753
    %v755 = vperm.slane %v747, %v754
    %v756 = vrot.slane %v719, 4
    %v757 = vsel %vm184, %v756, %v707
    %v758 = vrot.slane %v707, 4
    %v759 = vsel %vm184, %v719, %v758
    %v761 = vunpack.c.l.s4 1934713408
    %v762 = vunpack.c.0.s8 %v761
    %v763 = vperm.slane %v757, %v762
    %v765 = vunpack.c.l.s4 1934713408
    %v766 = vunpack.c.0.s8 %v765
    %v767 = vperm.slane %v759, %v766
    %v768 = vrot.slane %v739, 4
    %v769 = vsel %vm184, %v768, %v727
    %v770 = vrot.slane %v727, 4
    %v771 = vsel %vm184, %v739, %v770
    %v773 = vunpack.c.l.s4 1934713408
    %v774 = vunpack.c.0.s8 %v773
    %v775 = vperm.slane %v769, %v774
    %v777 = vunpack.c.l.s4 1934713408
    %v778 = vunpack.c.0.s8 %v777
    %v779 = vperm.slane %v771, %v778
    %v780 = vrot.slane %v743, 4
    %v781 = vsel %vm184, %v780, %v731
    %v782 = vrot.slane %v731, 4
    %v783 = vsel %vm184, %v743, %v782
    %v785 = vunpack.c.l.s4 1934713408
    %v786 = vunpack.c.0.s8 %v785
    %v787 = vperm.slane %v781, %v786
    %v789 = vunpack.c.l.s4 1934713408
    %v790 = vunpack.c.0.s8 %v789
    %v791 = vperm.slane %v783, %v790
    %v792 = vrot.slane %v775, 4
    %v793 = vsel %vm184, %v792, %v751
    %v794 = vrot.slane %v751, 4
    %v795 = vsel %vm184, %v775, %v794
    %v796 = vrot.slane %v779, 4
    %v797 = vsel %vm184, %v796, %v755
    %v798 = vrot.slane %v755, 4
    %v799 = vsel %vm184, %v779, %v798
    %v800 = vrot.slane %v787, 4
    %v801 = vsel %vm184, %v800, %v763
    %v802 = vrot.slane %v763, 4
    %v803 = vsel %vm184, %v787, %v802
    %v804 = vrot.slane %v791, 4
    %v805 = vsel %vm184, %v804, %v767
    %v806 = vrot.slane %v767, 4
    %v807 = vsel %vm184, %v791, %v806
    %809 = vrot.lane.b32.xlu0 %v683, 16
    %v810 = vpop.permute.xlu0 %809
    %813 = vrot.lane.b32.xlu0 %v685, 32
    %v814 = vpop.permute.xlu0 %813
    %817 = vrot.lane.b32.xlu0 %v687, 48
    %v818 = vpop.permute.xlu0 %817
    %821 = vrot.lane.b32.xlu0 %v689, 64
    %v822 = vpop.permute.xlu0 %821
    %825 = vrot.lane.b32.xlu0 %v691, 80
    %v826 = vpop.permute.xlu0 %825
    %829 = vrot.lane.b32.xlu0 %v693, 96
    %v830 = vpop.permute.xlu0 %829
    %833 = vrot.lane.b32.xlu0 %v695, 112
    %v834 = vpop.permute.xlu0 %833
    %837 = vrot.lane.b32.xlu0 %v795, 16
    %v838 = vpop.permute.xlu0 %837
    %841 = vrot.lane.b32.xlu0 %v797, 32
    %v842 = vpop.permute.xlu0 %841
    %845 = vrot.lane.b32.xlu0 %v799, 48
    %v846 = vpop.permute.xlu0 %845
    %849 = vrot.lane.b32.xlu0 %v801, 64
    %v850 = vpop.permute.xlu0 %849
    %853 = vrot.lane.b32.xlu0 %v803, 80
    %v854 = vpop.permute.xlu0 %853
    %857 = vrot.lane.b32.xlu0 %v805, 96
    %v858 = vpop.permute.xlu0 %857
    %861 = vrot.lane.b32.xlu0 %v807, 112
    %v862 = vpop.permute.xlu0 %861
    %v864 = vsel %vm65, %v681, %v810
    %v865 = vsel %vm67, %v864, %v814
    %v866 = vsel %vm69, %v865, %v818
    %v867 = vsel %vm71, %v866, %v822
    %v868 = vsel %vm73, %v867, %v826
    %v869 = vsel %vm75, %v868, %v830
    %v870 = vsel %vm77, %v869, %v834
    %v871 = vsel %vm65, %v793, %v838
    %v872 = vsel %vm67, %v871, %v842
    %v873 = vsel %vm69, %v872, %v846
    %v874 = vsel %vm71, %v873, %v850
    %v875 = vsel %vm73, %v874, %v854
    %v876 = vsel %vm75, %v875, %v858
    %v877 = vsel %vm77, %v876, %v862
    %v878 = vmul.f32 %v870, %v78
    %v879 = vmul.f32 %v877, %v78
    %v880 = vld [vmem:[#allocation2] sm:$0xff]
    %v881 = vld [vmem:[#allocation3] sm:$0xff]
    %v882 = vld [vmem:[#allocation3 + $0x8] sm:$0xff]
    %v883 = vld [vmem:[#allocation3 + $0x10] sm:$0xff]
    %v884 = vld [vmem:[#allocation3 + $0x18] sm:$0xff]
    %v885 = vld [vmem:[#allocation3 + $0x20] sm:$0xff]
    %v886 = vld [vmem:[#allocation3 + $0x28] sm:$0xff]
    %v887 = vld [vmem:[#allocation3 + $0x30] sm:$0xff]
    %v888 = vld [vmem:[#allocation3 + $0x38] sm:$0xff]
    %v889 = vld [vmem:[#allocation3 + $0x40] sm:$0xff]
    %v890 = vld [vmem:[#allocation3 + $0x48] sm:$0xff]
    %v891 = vld [vmem:[#allocation3 + $0x50] sm:$0xff]
    %v892 = vld [vmem:[#allocation3 + $0x58] sm:$0xff]
    %v893 = vld [vmem:[#allocation3 + $0x60] sm:$0xff]
    %v894 = vld [vmem:[#allocation3 + $0x68] sm:$0xff]
    %v895 = vld [vmem:[#allocation3 + $0x70] sm:$0xff]
    %v896 = vld [vmem:[#allocation3 + $0x78] sm:$0xff]
    %v897 = vld [vmem:[#allocation3 + $0x80] sm:$0xff]
    %v898 = vld [vmem:[#allocation3 + $0x88] sm:$0xff]
    %v899 = vld [vmem:[#allocation3 + $0x90] sm:$0xff]
    %v900 = vld [vmem:[#allocation3 + $0x98] sm:$0xff]
    %v901 = vld [vmem:[#allocation3 + $0xa0] sm:$0xff]
    %v902 = vld [vmem:[#allocation3 + $0xa8] sm:$0xff]
    %v903 = vld [vmem:[#allocation3 + $0xb0] sm:$0xff]
    %v904 = vld [vmem:[#allocation3 + $0xb8] sm:$0xff]
    %v905 = vld [vmem:[#allocation3 + $0xc0] sm:$0xff]
    %v906 = vld [vmem:[#allocation3 + $0xc8] sm:$0xff]
    %v907 = vld [vmem:[#allocation3 + $0xd0] sm:$0xff]
    %v908 = vld [vmem:[#allocation3 + $0xd8] sm:$0xff]
    %v909 = vld [vmem:[#allocation3 + $0xe0] sm:$0xff]
    %v910 = vld [vmem:[#allocation3 + $0xe8] sm:$0xff]
    %v911 = vld [vmem:[#allocation3 + $0xf0] sm:$0xff]
    %v912 = vld [vmem:[#allocation3 + $0xf8] sm:$0xff]
    %s913 = scalar_lea.vmem [#allocation3], 256
    %v914 = vld [vmem:[%s913] sm:$0xff]
    %v915 = vld [vmem:[%s913 + $0x8] sm:$0xff]
    %v916 = vld [vmem:[%s913 + $0x10] sm:$0xff]
    %v917 = vld [vmem:[%s913 + $0x18] sm:$0xff]
    %v918 = vld [vmem:[%s913 + $0x20] sm:$0xff]
    %v919 = vld [vmem:[%s913 + $0x28] sm:$0xff]
    %v920 = vld [vmem:[%s913 + $0x30] sm:$0xff]
    %v921 = vld [vmem:[%s913 + $0x38] sm:$0xff]
    %v922 = vld [vmem:[%s913 + $0x40] sm:$0xff]
    %v923 = vld [vmem:[%s913 + $0x48] sm:$0xff]
    %v924 = vld [vmem:[%s913 + $0x50] sm:$0xff]
    %v925 = vld [vmem:[%s913 + $0x58] sm:$0xff]
    %v926 = vld [vmem:[%s913 + $0x60] sm:$0xff]
    %v927 = vld [vmem:[%s913 + $0x68] sm:$0xff]
    %v928 = vld [vmem:[%s913 + $0x70] sm:$0xff]
    %v929 = vld [vmem:[%s913 + $0x78] sm:$0xff]
    %v930 = vld [vmem:[%s913 + $0x80] sm:$0xff]
    %v931 = vld [vmem:[%s913 + $0x88] sm:$0xff]
    %v932 = vld [vmem:[%s913 + $0x90] sm:$0xff]
    %v933 = vld [vmem:[%s913 + $0x98] sm:$0xff]
    %v934 = vld [vmem:[%s913 + $0xa0] sm:$0xff]
    %v935 = vld [vmem:[%s913 + $0xa8] sm:$0xff]
    %v936 = vld [vmem:[%s913 + $0xb0] sm:$0xff]
    %v937 = vld [vmem:[%s913 + $0xb8] sm:$0xff]
    %v938 = vld [vmem:[%s913 + $0xc0] sm:$0xff]
    %v939 = vld [vmem:[%s913 + $0xc8] sm:$0xff]
    %v940 = vld [vmem:[%s913 + $0xd0] sm:$0xff]
    %v941 = vld [vmem:[%s913 + $0xd8] sm:$0xff]
    %v942 = vld [vmem:[%s913 + $0xe0] sm:$0xff]
    %v943 = vld [vmem:[%s913 + $0xe8] sm:$0xff]
    %v944 = vld [vmem:[%s913 + $0xf0] sm:$0xff]
    %v945 = vld [vmem:[%s913 + $0xf8] sm:$0xff]
    %946 = vmatpush.msra.mxu0 %v929
    %947 = vmatpush.msra.mxu0 %v928
    %948 = vmatpush.msra.mxu0 %v927
    %949 = vmatpush.msra.mxu0 %v926
    %950 = vmatpush.msra.mxu0 %v925
    %951 = vmatpush.msra.mxu0 %v924
    %952 = vmatpush.msra.mxu0 %v923
    %953 = vmatpush.msra.mxu0 %v922
    %954 = vmatpush.msra.mxu0 %v921
    %955 = vmatpush.msra.mxu0 %v920
    %956 = vmatpush.msra.mxu0 %v919
    %957 = vmatpush.msra.mxu0 %v918
    %958 = vmatpush.msra.mxu0 %v917
    %959 = vmatpush.msra.mxu0 %v916
    %960 = vmatpush.msra.mxu0 %v915
    %961 = vmatpush.msra.mxu0 %v914
    %962 = vmatmul.f32.gmra.mxu0 %v878
    %v963 = vpop.f32.mrf.mxu0
    %v964 = vadd.f32 0.0, %v963
    %965 = vdwg.mxu0
    %966 = vmatpush.msra.mxu0 %v945
    %967 = vmatpush.msra.mxu0 %v944
    %968 = vmatpush.msra.mxu0 %v943
    %969 = vmatpush.msra.mxu0 %v942
    %970 = vmatpush.msra.mxu0 %v941
    %971 = vmatpush.msra.mxu0 %v940
    %972 = vmatpush.msra.mxu0 %v939
    %973 = vmatpush.msra.mxu0 %v938
    %974 = vmatpush.msra.mxu0 %v937
    %975 = vmatpush.msra.mxu0 %v936
    %976 = vmatpush.msra.mxu0 %v935
    %977 = vmatpush.msra.mxu0 %v934
    %978 = vmatpush.msra.mxu0 %v933
    %979 = vmatpush.msra.mxu0 %v932
    %980 = vmatpush.msra.mxu0 %v931
    %981 = vmatpush.msra.mxu0 %v930
    %982 = vmatmul.f32.gmra.mxu0 %v879
    %v983 = vpop.f32.mrf.mxu0
    %v984 = vadd.f32 %v964, %v983
    %985 = vdwg.mxu0
    %986 = vmatpush.msra.mxu0 %v896
    %987 = vmatpush.msra.mxu0 %v895
    %988 = vmatpush.msra.mxu0 %v894
    %989 = vmatpush.msra.mxu0 %v893
    %990 = vmatpush.msra.mxu0 %v892
    %991 = vmatpush.msra.mxu0 %v891
    %992 = vmatpush.msra.mxu0 %v890
    %993 = vmatpush.msra.mxu0 %v889
    %994 = vmatpush.msra.mxu0 %v888
    %995 = vmatpush.msra.mxu0 %v887
    %996 = vmatpush.msra.mxu0 %v886
    %997 = vmatpush.msra.mxu0 %v885
    %998 = vmatpush.msra.mxu0 %v884
    %999 = vmatpush.msra.mxu0 %v883
    %1000 = vmatpush.msra.mxu0 %v882
    %1001 = vmatpush.msra.mxu0 %v881
    %1002 = vmatmul.f32.gmra.mxu0 %v478
    %v1003 = vpop.f32.mrf.mxu0
    %v1004 = vadd.f32 %v984, %v1003
    %1005 = vdwg.mxu0
    %1006 = vmatpush.msra.mxu0 %v912
    %1007 = vmatpush.msra.mxu0 %v911
    %1008 = vmatpush.msra.mxu0 %v910
    %1009 = vmatpush.msra.mxu0 %v909
    %1010 = vmatpush.msra.mxu0 %v908
    %1011 = vmatpush.msra.mxu0 %v907
    %1012 = vmatpush.msra.mxu0 %v906
    %1013 = vmatpush.msra.mxu0 %v905
    %1014 = vmatpush.msra.mxu0 %v904
    %1015 = vmatpush.msra.mxu0 %v903
    %1016 = vmatpush.msra.mxu0 %v902
    %1017 = vmatpush.msra.mxu0 %v901
    %1018 = vmatpush.msra.mxu0 %v900
    %1019 = vmatpush.msra.mxu0 %v899
    %1020 = vmatpush.msra.mxu0 %v898
    %1021 = vmatpush.msra.mxu0 %v897
    %1022 = vmatmul.f32.gmra.mxu0 %v479
    %v1023 = vpop.f32.mrf.mxu0
    %v1024 = vadd.f32 %v1004, %v1023
    %1025 = vdwg.mxu0
    %v1026 = vadd.f32 %v880, %v1024
    %1027 = vst [vmem:[#allocation2] sm:$0xff] %v1026
    // Predicated region
    $region26: #{_lambda_.1} parent=1 // pred_check
      %p1028 = pneg %p34
    $region27: #{_lambda_.1} parent=1 // pred_check_branch
      %1030 = sbr.rel (%p1028) target = $region29
    $region28: #{_lambda_.1} parent=1 // pred_region
      %v1031 = vld [vmem:[#allocation2] sm:$0xff]
      %v1032 = vld [vmem:[%s3] sm:$0x1]
      %v1034 = vperm.slane %v1032, 0
      %v1036 = vadd.f32 %v1031, %v1034
      %1037 = vst [vmem:[#allocation6] sm:$0xff] %v1036
    $region29: #{_lambda_.1} parent=1 // pred_fallthru
      _
    // Predicated region
    $region30: #{_lambda_.1} parent=1 // pred_check
      _
    $region31: #{_lambda_.1} parent=1 // pred_check_branch
      %1039 = sbr.rel (0) target = $region33
    $region32: #{_lambda_.1} parent=1 // pred_region
      %1041 = vsyncadd [#allocation5], 0
      %s1043 = sshll.u32 [#allocation6], 4
      %s1044 = int_to_ptr.vmem [resolvable:$true] %s1043
      %s1045 = sshll.u32 %s4, 4
      %s1046 = int_to_ptr.hbm [resolvable:$true] %s1045
      %1048 = dma.vmem_to_hbm [thread:$0]  %s1044, 128, %s1046, [#allocation5]
    $region33: #{_lambda_.1} parent=1 // pred_fallthru
      _
    // Predicated region
    $region34: #{_lambda_.1} parent=1 // pred_check
      _
    $region35: #{_lambda_.1} parent=1 // pred_check_branch
      %1050 = sbr.rel (0) target = $region37
    $region36: #{_lambda_.1} parent=1 // pred_region
      %1052 = dma.done [#allocation5], 128
    $region37: #{_lambda_.1} parent=1 // pred_fallthru
      _
    %1053 = vsyncpa [#allocation4], 1
    %1054 = vsyncpa [#allocation5], 1

</llo_original>
